<compile_context>
chip_gen: v7x
topology: tpu7x:2x2x1
jax: 0.10.0
libtpu: 0.0.40
codegen_flags: <defaults>
</compile_context>

<pallas_src>
import jax
import jax.numpy as jnp
from jax.experimental import pallas as pl
from jax.experimental.pallas import tpu as pltpu

LEAKY_SLOPE = 0.2
BN_EPS = 1e-5
LANE = 128
NEG_BIG = -1e30  # masked-logit fill for segment softmax


# ------------------------- fused Pallas kernel -------------------------

def _make_fused_kernel(B, W, Cin, c1, c2, c3, segments):
    """segments: static tuple of (start, stop) output-column ranges for the aux
    softmax heads; column 0 is the sigmoid validity head."""
    L1, L2, L3 = W // 2, W // 4, W // 8

    def leaky(y):
        return jnp.where(y > 0, y, LEAKY_SLOPE * y)

    def im2col_batch(a_b, L_out):
        # a_b: (L_in, C) single batch element; conv1d with k=4, s=2, p=1.
        # Only static slices + concats (Mosaic-safe), zero-pad via concat.
        C = a_b.shape[1]
        zero = jnp.zeros((1, C), jnp.float32)
        ap = jnp.concatenate([zero, a_b, zero], axis=0)          # (L_in + 2, C)
        rows = []
        for t in range(L_out):
            taps = [ap[2 * t + k: 2 * t + k + 1, :] for k in range(4)]
            rows.append(jnp.concatenate(taps, axis=1))           # (1, 4*C), idx = k*C + c
        return jnp.concatenate(rows, axis=0)                     # (L_out, 4*C)

    def conv(a, L_in, L_out, w_ref, b_ref):
        # a: (B*L_in, C) -> (B*L_out, Cout); conv = im2col + single MXU matmul + bias
        patches = jnp.concatenate(
            [im2col_batch(a[b * L_in:(b + 1) * L_in, :], L_out) for b in range(B)],
            axis=0)                                              # (B*L_out, 4*C)
        y = jnp.dot(patches, w_ref[...], preferred_element_type=jnp.float32)
        return y + b_ref[...]

    def batchnorm(y, g_ref, beta_ref):
        # train-mode BatchNorm1d: batch stats over all (B, L) rows, biased var, f32
        mean = jnp.mean(y, axis=0, keepdims=True)
        var = jnp.mean((y - mean) ** 2, axis=0, keepdims=True)
        return (y - mean) * jax.lax.rsqrt(var + BN_EPS) * g_ref[...] + beta_ref[...]

    def kernel(p1_ref, w1_ref, b1_ref,
               w2_ref, b2_ref, g2_ref, be2_ref,
               w3_ref, b3_ref, g3_ref, be3_ref,
               hw_ref, hb_ref, o_ref):
        # conv1 (+LReLU): im2col was hoisted to XLA, so this is one MXU matmul.
        y1 = jnp.dot(p1_ref[...], w1_ref[...],
                     preferred_element_type=jnp.float32) + b1_ref[...]
        a1 = leaky(y1)                                           # (B*L1, c1)
        a2 = leaky(batchnorm(conv(a1, L1, L2, w2_ref, b2_ref), g2_ref, be2_ref))
        a3 = leaky(batchnorm(conv(a2, L2, L3, w3_ref, b3_ref), g3_ref, be3_ref))

        # Flatten to (B, L3*c3) in channels-last (l*c3 + c) order; head weights
        # were row-permuted once outside so this matches PyTorch's NCW flatten.
        feat = jnp.concatenate(
            [jnp.concatenate(
                [a3[b * L3 + l: b * L3 + l + 1, :] for l in range(L3)], axis=1)
             for b in range(B)],
            axis=0)                                              # (B, L3*c3)

        # One lane-padded matmul for every head.
        y = jnp.dot(feat, hw_ref[...],
                    preferred_element_type=jnp.float32) + hb_ref[...]
        col = jax.lax.broadcasted_iota(jnp.int32, y.shape, 1)

        # Validity head (column 0): numerically stable sigmoid.
        z = jnp.exp(-jnp.abs(y))
        sig = jnp.where(y >= 0, 1.0 / (1.0 + z), z / (1.0 + z))
        out = jnp.where(col == 0, sig, jnp.zeros_like(y))

        # Aux heads: segment-wise softmax over static column ranges.
        # Exact division (no approx reciprocal) so row sums are exactly 1.
        for start, stop in segments:
            m = (col >= start) & (col < stop)
            ymask = jnp.where(m, y, NEG_BIG)
            mx = jnp.max(ymask, axis=1, keepdims=True)
            e = jnp.exp(ymask - mx)                              # masked lanes -> 0
            s = jnp.sum(e, axis=1, keepdims=True)                # >= 1 (max lane = 1)
            out = jnp.where(m, e / s, out)

        o_ref[...] = out                                         # (B, H_pad) lane-dense store

    return kernel


# ------------------------- params & forward -------------------------

def init_params(key, window_length, input_dim, base_channels, categorical_dims):
    c1, c2, c3 = base_channels // 4, base_channels // 2, base_channels
    feat_dim = window_length // 8 * base_channels
    keys = jax.random.split(key, 13)

    def w(k, shape, scale=0.1):
        return scale * jax.random.normal(k, shape, dtype=jnp.float32)

    params = {
        "conv1_w": w(keys[0], (4, input_dim, c1)),   # (K, Cin, Cout)
        "conv1_b": w(keys[1], (1, c1)),
        "conv2_w": w(keys[2], (4, c1, c2)),
        "conv2_b": w(keys[3], (1, c2)),
        "bn2_g": 1.0 + w(keys[4], (1, c2)),
        "bn2_b": w(keys[5], (1, c2)),
        "conv3_w": w(keys[6], (4, c2, c3)),
        "conv3_b": w(keys[7], (1, c3)),
        "bn3_g": 1.0 + w(keys[8], (1, c3)),
        "bn3_b": w(keys[9], (1, c3)),
        # FC heads stored with PyTorch feature ordering (c*L + l) in the rows.
        "fc_w": w(keys[10], (feat_dim, 1)),
        "fc_b": w(keys[11], (1, 1)),
    }
    aux = {}
    ak = jax.random.split(keys[12], 2 * max(len(categorical_dims), 1))
    for i, (name, n_classes) in enumerate(categorical_dims.items()):
        aux[name] = {
            "w": w(ak[2 * i], (feat_dim, n_classes)),
            "b": w(ak[2 * i + 1], (1, n_classes)),
        }
    params["aux"] = aux
    return params


def _im2col_input(x):
    """x: (B, W, Cin) -> (B*(W//2), 4*Cin) conv1 patches (k=4, s=2, p=1).
    Column index = k*Cin + c, matching conv1_w.reshape(4*Cin, c1)."""
    B, W, Cin = x.shape
    L1 = W // 2
    xp = jnp.pad(x, ((0, 0), (1, 1), (0, 0)))
    idx = 2 * jnp.arange(L1)[:, None] + jnp.arange(4)[None, :]    # (L1, 4)
    patches = xp[:, idx, :]                                       # (B, L1, 4, Cin)
    return patches.reshape(B * L1, 4 * Cin)


def discriminator_forward(params, x):
    """x: (B, window_length, input_dim) float32 (same input as the PyTorch forward)."""
    B, W, Cin = x.shape
    c1 = params["conv1_w"].shape[-1]
    c2 = params["conv2_w"].shape[-1]
    c3 = params["conv3_w"].shape[-1]
    L3 = W // 8
    feat_dim = L3 * c3

    aux_names = list(params["aux"].keys())
    aux_sizes = [params["aux"][n]["w"].shape[1] for n in aux_names]

    # ---- pack all FC heads into one lane-padded matmul ----
    # PyTorch flattens NCW (feature index = c*L3 + l); the kernel flattens
    # channels-last (l*c3 + c), so permute the head weight ROWS once here —
    # this replaces the per-forward activation transpose for free.
    w_heads = jnp.concatenate(
        [params["fc_w"]] + [params["aux"][n]["w"] for n in aux_names], axis=1)
    b_heads = jnp.concatenate(
        [params["fc_b"]] + [params["aux"][n]["b"] for n in aux_names], axis=1)
    w_heads = w_heads.reshape(c3, L3, -1).transpose(1, 0, 2).reshape(feat_dim, -1)
    n_cols = w_heads.shape[1]
    h_pad = ((n_cols + LANE - 1) // LANE) * LANE
    w_heads = jnp.pad(w_heads, ((0, 0), (0, h_pad - n_cols)))
    b_heads = jnp.pad(b_heads, ((0, 0), (0, h_pad - n_cols)))

    segments = []
    start = 1
    for n in aux_sizes:
        segments.append((start, start + n))
        start += n

    kernel = _make_fused_kernel(B, W, Cin, c1, c2, c3, tuple(segments))

    inputs = (
        _im2col_input(x),
        params["conv1_w"].reshape(-1, c1), params["conv1_b"],
        params["conv2_w"].reshape(-1, c2), params["conv2_b"],
        params["bn2_g"], params["bn2_b"],
        params["conv3_w"].reshape(-1, c3), params["conv3_b"],
        params["bn3_g"], params["bn3_b"],
        w_heads, b_heads,
    )

    # Whole forward = one kernel, no grid: everything fits comfortably in VMEM.
    # TODO(synk): at much larger batch, add a grid over B with
    # dimension_semantics=("parallel",) (BN stats would then need a 2-pass scheme).
    out = pl.pallas_call(
        kernel,
        out_shape=jax.ShapeDtypeStruct((B, h_pad), jnp.float32),
        in_specs=[pl.BlockSpec(memory_space=pltpu.MemorySpace.VMEM) for _ in inputs],
        out_specs=pl.BlockSpec(memory_space=pltpu.MemorySpace.VMEM),
    )(*inputs)

    validity = out[:, 0:1]
    aux_outputs = {}
    for name, (s0, s1) in zip(aux_names, segments):
        aux_outputs[name] = out[:, s0:s1]
    return validity, aux_outputs


if __name__ == "__main__":
    WINDOW, INPUT_DIM, BASE_CH, BATCH = 16, 4, 32, 2
    categorical_dims = {"cat_a": 3, "cat_b": 5}

    key = jax.random.PRNGKey(0)
    kp, kx = jax.random.split(key)
    params = init_params(kp, WINDOW, INPUT_DIM, BASE_CH, categorical_dims)
    x = jax.random.normal(kx, (BATCH, WINDOW, INPUT_DIM), dtype=jnp.float32)

    fwd = jax.jit(discriminator_forward)
    validity, aux = fwd(params, x)
    validity, aux = jax.block_until_ready((validity, aux))

    assert validity.shape == (BATCH, 1)
    assert bool(jnp.all(jnp.isfinite(validity)))
    assert bool(jnp.all((validity >= 0.0) & (validity <= 1.0)))
    for name, n_classes in categorical_dims.items():
        assert aux[name].shape == (BATCH, n_classes)
        assert bool(jnp.all(aux[name] >= 0.0))
        # exact in-kernel normalization -> row sums are 1 to f32 rounding
        assert bool(jnp.allclose(jnp.sum(aux[name], axis=1), 1.0, atol=1e-3))
    print("KERNEL_OK")
</pallas_src>

<mosaic_0001>
module attributes {stable_mosaic.version = 11 : i64} {
  func.func @kernel(%arg0: memref<16x16xf32, #tpu.memory_space<vmem>>, %arg1: memref<16x8xf32, #tpu.memory_space<vmem>>, %arg2: memref<1x8xf32, #tpu.memory_space<vmem>>, %arg3: memref<32x16xf32, #tpu.memory_space<vmem>>, %arg4: memref<1x16xf32, #tpu.memory_space<vmem>>, %arg5: memref<1x16xf32, #tpu.memory_space<vmem>>, %arg6: memref<1x16xf32, #tpu.memory_space<vmem>>, %arg7: memref<64x32xf32, #tpu.memory_space<vmem>>, %arg8: memref<1x32xf32, #tpu.memory_space<vmem>>, %arg9: memref<1x32xf32, #tpu.memory_space<vmem>>, %arg10: memref<1x32xf32, #tpu.memory_space<vmem>>, %arg11: memref<64x128xf32, #tpu.memory_space<vmem>>, %arg12: memref<1x128xf32, #tpu.memory_space<vmem>>, %arg13: memref<2x128xf32, #tpu.memory_space<vmem>>) attributes {dimension_semantics = [], scalar_prefetch = 0 : i64, scratch_operands = 0 : i64, tpu.core_type = #tpu.core_type<tc>} {
    %c0 = arith.constant 0 : index
    %c0_0 = arith.constant 0 : index
    %0 = vector.load %arg0[%c0, %c0_0] : memref<16x16xf32, #tpu.memory_space<vmem>>, vector<16x16xf32>
    %c0_1 = arith.constant 0 : index
    %c0_2 = arith.constant 0 : index
    %1 = vector.load %arg1[%c0_1, %c0_2] : memref<16x8xf32, #tpu.memory_space<vmem>>, vector<16x8xf32>
    %cst = arith.constant dense<0.000000e+00> : vector<16x8xf32>
    %2 = tpu.matmul %0, %1, %cst {dimension_numbers = #tpu.dot_dimension_numbers<[1], [0], [0], [1], [0, 0, 1, 1], [], []>} : vector<16x16xf32>, vector<16x8xf32>, vector<16x8xf32> -> vector<16x8xf32>
    %c0_3 = arith.constant 0 : index
    %c0_4 = arith.constant 0 : index
    %3 = vector.load %arg2[%c0_3, %c0_4] : memref<1x8xf32, #tpu.memory_space<vmem>>, vector<1x8xf32>
    %4 = vector.broadcast %3 : vector<1x8xf32> to vector<16x8xf32>
    %5 = arith.addf %2, %4 : vector<16x8xf32>
    %cst_5 = arith.constant 0.000000e+00 : f32
    %6 = vector.broadcast %cst_5 : f32 to vector<16x8xf32>
    %7 = arith.cmpf ogt, %5, %6 : vector<16x8xf32>
    %cst_6 = arith.constant 2.000000e-01 : f32
    %8 = vector.broadcast %cst_6 : f32 to vector<16x8xf32>
    %9 = arith.mulf %8, %5 : vector<16x8xf32>
    %10 = arith.select %7, %5, %9 : vector<16x8xi1>, vector<16x8xf32>
    %11 = vector.extract_strided_slice %10 {offsets = [0, 0], sizes = [8, 8], strides = [1, 1]} : vector<16x8xf32> to vector<8x8xf32>
    %cst_7 = arith.constant 0.000000e+00 : f32
    %12 = vector.broadcast %cst_7 : f32 to vector<1x8xf32>
    %13 = tpu.concatenate %12, %11, %12 in 0 : vector<1x8xf32>, vector<8x8xf32>, vector<1x8xf32> -> vector<10x8xf32>
    %14 = vector.extract_strided_slice %13 {offsets = [0, 0], sizes = [1, 8], strides = [1, 1]} : vector<10x8xf32> to vector<1x8xf32>
    %15 = vector.extract_strided_slice %13 {offsets = [1, 0], sizes = [1, 8], strides = [1, 1]} : vector<10x8xf32> to vector<1x8xf32>
    %16 = vector.extract_strided_slice %13 {offsets = [2, 0], sizes = [1, 8], strides = [1, 1]} : vector<10x8xf32> to vector<1x8xf32>
    %17 = vector.extract_strided_slice %13 {offsets = [3, 0], sizes = [1, 8], strides = [1, 1]} : vector<10x8xf32> to vector<1x8xf32>
    %18 = tpu.concatenate %14, %15, %16, %17 in 1 : vector<1x8xf32>, vector<1x8xf32>, vector<1x8xf32>, vector<1x8xf32> -> vector<1x32xf32>
    %19 = vector.extract_strided_slice %13 {offsets = [2, 0], sizes = [1, 8], strides = [1, 1]} : vector<10x8xf32> to vector<1x8xf32>
    %20 = vector.extract_strided_slice %13 {offsets = [3, 0], sizes = [1, 8], strides = [1, 1]} : vector<10x8xf32> to vector<1x8xf32>
    %21 = vector.extract_strided_slice %13 {offsets = [4, 0], sizes = [1, 8], strides = [1, 1]} : vector<10x8xf32> to vector<1x8xf32>
    %22 = vector.extract_strided_slice %13 {offsets = [5, 0], sizes = [1, 8], strides = [1, 1]} : vector<10x8xf32> to vector<1x8xf32>
    %23 = tpu.concatenate %19, %20, %21, %22 in 1 : vector<1x8xf32>, vector<1x8xf32>, vector<1x8xf32>, vector<1x8xf32> -> vector<1x32xf32>
    %24 = vector.extract_strided_slice %13 {offsets = [4, 0], sizes = [1, 8], strides = [1, 1]} : vector<10x8xf32> to vector<1x8xf32>
    %25 = vector.extract_strided_slice %13 {offsets = [5, 0], sizes = [1, 8], strides = [1, 1]} : vector<10x8xf32> to vector<1x8xf32>
    %26 = vector.extract_strided_slice %13 {offsets = [6, 0], sizes = [1, 8], strides = [1, 1]} : vector<10x8xf32> to vector<1x8xf32>
    %27 = vector.extract_strided_slice %13 {offsets = [7, 0], sizes = [1, 8], strides = [1, 1]} : vector<10x8xf32> to vector<1x8xf32>
    %28 = tpu.concatenate %24, %25, %26, %27 in 1 : vector<1x8xf32>, vector<1x8xf32>, vector<1x8xf32>, vector<1x8xf32> -> vector<1x32xf32>
    %29 = vector.extract_strided_slice %13 {offsets = [6, 0], sizes = [1, 8], strides = [1, 1]} : vector<10x8xf32> to vector<1x8xf32>
    %30 = vector.extract_strided_slice %13 {offsets = [7, 0], sizes = [1, 8], strides = [1, 1]} : vector<10x8xf32> to vector<1x8xf32>
    %31 = vector.extract_strided_slice %13 {offsets = [8, 0], sizes = [1, 8], strides = [1, 1]} : vector<10x8xf32> to vector<1x8xf32>
    %32 = vector.extract_strided_slice %13 {offsets = [9, 0], sizes = [1, 8], strides = [1, 1]} : vector<10x8xf32> to vector<1x8xf32>
    %33 = tpu.concatenate %29, %30, %31, %32 in 1 : vector<1x8xf32>, vector<1x8xf32>, vector<1x8xf32>, vector<1x8xf32> -> vector<1x32xf32>
    %34 = tpu.concatenate %18, %23, %28, %33 in 0 : vector<1x32xf32>, vector<1x32xf32>, vector<1x32xf32>, vector<1x32xf32> -> vector<4x32xf32>
    %35 = vector.extract_strided_slice %10 {offsets = [8, 0], sizes = [8, 8], strides = [1, 1]} : vector<16x8xf32> to vector<8x8xf32>
    %cst_8 = arith.constant 0.000000e+00 : f32
    %36 = vector.broadcast %cst_8 : f32 to vector<1x8xf32>
    %37 = tpu.concatenate %36, %35, %36 in 0 : vector<1x8xf32>, vector<8x8xf32>, vector<1x8xf32> -> vector<10x8xf32>
    %38 = vector.extract_strided_slice %37 {offsets = [0, 0], sizes = [1, 8], strides = [1, 1]} : vector<10x8xf32> to vector<1x8xf32>
    %39 = vector.extract_strided_slice %37 {offsets = [1, 0], sizes = [1, 8], strides = [1, 1]} : vector<10x8xf32> to vector<1x8xf32>
    %40 = vector.extract_strided_slice %37 {offsets = [2, 0], sizes = [1, 8], strides = [1, 1]} : vector<10x8xf32> to vector<1x8xf32>
    %41 = vector.extract_strided_slice %37 {offsets = [3, 0], sizes = [1, 8], strides = [1, 1]} : vector<10x8xf32> to vector<1x8xf32>
    %42 = tpu.concatenate %38, %39, %40, %41 in 1 : vector<1x8xf32>, vector<1x8xf32>, vector<1x8xf32>, vector<1x8xf32> -> vector<1x32xf32>
    %43 = vector.extract_strided_slice %37 {offsets = [2, 0], sizes = [1, 8], strides = [1, 1]} : vector<10x8xf32> to vector<1x8xf32>
    %44 = vector.extract_strided_slice %37 {offsets = [3, 0], sizes = [1, 8], strides = [1, 1]} : vector<10x8xf32> to vector<1x8xf32>
    %45 = vector.extract_strided_slice %37 {offsets = [4, 0], sizes = [1, 8], strides = [1, 1]} : vector<10x8xf32> to vector<1x8xf32>
    %46 = vector.extract_strided_slice %37 {offsets = [5, 0], sizes = [1, 8], strides = [1, 1]} : vector<10x8xf32> to vector<1x8xf32>
    %47 = tpu.concatenate %43, %44, %45, %46 in 1 : vector<1x8xf32>, vector<1x8xf32>, vector<1x8xf32>, vector<1x8xf32> -> vector<1x32xf32>
    %48 = vector.extract_strided_slice %37 {offsets = [4, 0], sizes = [1, 8], strides = [1, 1]} : vector<10x8xf32> to vector<1x8xf32>
    %49 = vector.extract_strided_slice %37 {offsets = [5, 0], sizes = [1, 8], strides = [1, 1]} : vector<10x8xf32> to vector<1x8xf32>
    %50 = vector.extract_strided_slice %37 {offsets = [6, 0], sizes = [1, 8], strides = [1, 1]} : vector<10x8xf32> to vector<1x8xf32>
    %51 = vector.extract_strided_slice %37 {offsets = [7, 0], sizes = [1, 8], strides = [1, 1]} : vector<10x8xf32> to vector<1x8xf32>
    %52 = tpu.concatenate %48, %49, %50, %51 in 1 : vector<1x8xf32>, vector<1x8xf32>, vector<1x8xf32>, vector<1x8xf32> -> vector<1x32xf32>
    %53 = vector.extract_strided_slice %37 {offsets = [6, 0], sizes = [1, 8], strides = [1, 1]} : vector<10x8xf32> to vector<1x8xf32>
    %54 = vector.extract_strided_slice %37 {offsets = [7, 0], sizes = [1, 8], strides = [1, 1]} : vector<10x8xf32> to vector<1x8xf32>
    %55 = vector.extract_strided_slice %37 {offsets = [8, 0], sizes = [1, 8], strides = [1, 1]} : vector<10x8xf32> to vector<1x8xf32>
    %56 = vector.extract_strided_slice %37 {offsets = [9, 0], sizes = [1, 8], strides = [1, 1]} : vector<10x8xf32> to vector<1x8xf32>
    %57 = tpu.concatenate %53, %54, %55, %56 in 1 : vector<1x8xf32>, vector<1x8xf32>, vector<1x8xf32>, vector<1x8xf32> -> vector<1x32xf32>
    %58 = tpu.concatenate %42, %47, %52, %57 in 0 : vector<1x32xf32>, vector<1x32xf32>, vector<1x32xf32>, vector<1x32xf32> -> vector<4x32xf32>
    %59 = tpu.concatenate %34, %58 in 0 : vector<4x32xf32>, vector<4x32xf32> -> vector<8x32xf32>
    %c0_9 = arith.constant 0 : index
    %c0_10 = arith.constant 0 : index
    %60 = vector.load %arg3[%c0_9, %c0_10] : memref<32x16xf32, #tpu.memory_space<vmem>>, vector<32x16xf32>
    %cst_11 = arith.constant dense<0.000000e+00> : vector<8x16xf32>
    %61 = tpu.matmul %59, %60, %cst_11 {dimension_numbers = #tpu.dot_dimension_numbers<[1], [0], [0], [1], [0, 0, 1, 1], [], []>} : vector<8x32xf32>, vector<32x16xf32>, vector<8x16xf32> -> vector<8x16xf32>
    %c0_12 = arith.constant 0 : index
    %c0_13 = arith.constant 0 : index
    %62 = vector.load %arg4[%c0_12, %c0_13] : memref<1x16xf32, #tpu.memory_space<vmem>>, vector<1x16xf32>
    %63 = vector.broadcast %62 : vector<1x16xf32> to vector<8x16xf32>
    %64 = arith.addf %61, %63 : vector<8x16xf32>
    %cst_14 = arith.constant dense<0.000000e+00> : vector<16xf32>
    %65 = vector.multi_reduction <add>, %64, %cst_14 [0] : vector<8x16xf32> to vector<16xf32>
    %66 = vector.shape_cast %65 : vector<16xf32> to vector<1x16xf32>
    %cst_15 = arith.constant 8.000000e+00 : f32
    %67 = vector.broadcast %cst_15 : f32 to vector<1x16xf32>
    %68 = arith.divf %66, %67 : vector<1x16xf32>
    %69 = vector.broadcast %68 : vector<1x16xf32> to vector<8x16xf32>
    %70 = arith.subf %64, %69 : vector<8x16xf32>
    %71 = arith.mulf %70, %70 : vector<8x16xf32>
    %cst_16 = arith.constant dense<0.000000e+00> : vector<16xf32>
    %72 = vector.multi_reduction <add>, %71, %cst_16 [0] : vector<8x16xf32> to vector<16xf32>
    %73 = vector.shape_cast %72 : vector<16xf32> to vector<1x16xf32>
    %cst_17 = arith.constant 8.000000e+00 : f32
    %74 = vector.broadcast %cst_17 : f32 to vector<1x16xf32>
    %75 = arith.divf %73, %74 : vector<1x16xf32>
    %76 = vector.broadcast %68 : vector<1x16xf32> to vector<8x16xf32>
    %77 = arith.subf %64, %76 : vector<8x16xf32>
    %cst_18 = arith.constant 9.99999974E-6 : f32
    %78 = vector.broadcast %cst_18 : f32 to vector<1x16xf32>
    %79 = arith.addf %75, %78 : vector<1x16xf32>
    %80 = math.rsqrt %79 : vector<1x16xf32>
    %81 = vector.broadcast %80 : vector<1x16xf32> to vector<8x16xf32>
    %82 = arith.mulf %77, %81 : vector<8x16xf32>
    %c0_19 = arith.constant 0 : index
    %c0_20 = arith.constant 0 : index
    %83 = vector.load %arg5[%c0_19, %c0_20] : memref<1x16xf32, #tpu.memory_space<vmem>>, vector<1x16xf32>
    %84 = vector.broadcast %83 : vector<1x16xf32> to vector<8x16xf32>
    %85 = arith.mulf %82, %84 : vector<8x16xf32>
    %c0_21 = arith.constant 0 : index
    %c0_22 = arith.constant 0 : index
    %86 = vector.load %arg6[%c0_21, %c0_22] : memref<1x16xf32, #tpu.memory_space<vmem>>, vector<1x16xf32>
    %87 = vector.broadcast %86 : vector<1x16xf32> to vector<8x16xf32>
    %88 = arith.addf %85, %87 : vector<8x16xf32>
    %cst_23 = arith.constant 0.000000e+00 : f32
    %89 = vector.broadcast %cst_23 : f32 to vector<8x16xf32>
    %90 = arith.cmpf ogt, %88, %89 : vector<8x16xf32>
    %cst_24 = arith.constant 2.000000e-01 : f32
    %91 = vector.broadcast %cst_24 : f32 to vector<8x16xf32>
    %92 = arith.mulf %91, %88 : vector<8x16xf32>
    %93 = arith.select %90, %88, %92 : vector<8x16xi1>, vector<8x16xf32>
    %94 = vector.extract_strided_slice %93 {offsets = [0, 0], sizes = [4, 16], strides = [1, 1]} : vector<8x16xf32> to vector<4x16xf32>
    %cst_25 = arith.constant 0.000000e+00 : f32
    %95 = vector.broadcast %cst_25 : f32 to vector<1x16xf32>
    %96 = tpu.concatenate %95, %94, %95 in 0 : vector<1x16xf32>, vector<4x16xf32>, vector<1x16xf32> -> vector<6x16xf32>
    %97 = vector.extract_strided_slice %96 {offsets = [0, 0], sizes = [1, 16], strides = [1, 1]} : vector<6x16xf32> to vector<1x16xf32>
    %98 = vector.extract_strided_slice %96 {offsets = [1, 0], sizes = [1, 16], strides = [1, 1]} : vector<6x16xf32> to vector<1x16xf32>
    %99 = vector.extract_strided_slice %96 {offsets = [2, 0], sizes = [1, 16], strides = [1, 1]} : vector<6x16xf32> to vector<1x16xf32>
    %100 = vector.extract_strided_slice %96 {offsets = [3, 0], sizes = [1, 16], strides = [1, 1]} : vector<6x16xf32> to vector<1x16xf32>
    %101 = tpu.concatenate %97, %98, %99, %100 in 1 : vector<1x16xf32>, vector<1x16xf32>, vector<1x16xf32>, vector<1x16xf32> -> vector<1x64xf32>
    %102 = vector.extract_strided_slice %96 {offsets = [2, 0], sizes = [1, 16], strides = [1, 1]} : vector<6x16xf32> to vector<1x16xf32>
    %103 = vector.extract_strided_slice %96 {offsets = [3, 0], sizes = [1, 16], strides = [1, 1]} : vector<6x16xf32> to vector<1x16xf32>
    %104 = vector.extract_strided_slice %96 {offsets = [4, 0], sizes = [1, 16], strides = [1, 1]} : vector<6x16xf32> to vector<1x16xf32>
    %105 = vector.extract_strided_slice %96 {offsets = [5, 0], sizes = [1, 16], strides = [1, 1]} : vector<6x16xf32> to vector<1x16xf32>
    %106 = tpu.concatenate %102, %103, %104, %105 in 1 : vector<1x16xf32>, vector<1x16xf32>, vector<1x16xf32>, vector<1x16xf32> -> vector<1x64xf32>
    %107 = tpu.concatenate %101, %106 in 0 : vector<1x64xf32>, vector<1x64xf32> -> vector<2x64xf32>
    %108 = vector.extract_strided_slice %93 {offsets = [4, 0], sizes = [4, 16], strides = [1, 1]} : vector<8x16xf32> to vector<4x16xf32>
    %cst_26 = arith.constant 0.000000e+00 : f32
    %109 = vector.broadcast %cst_26 : f32 to vector<1x16xf32>
    %110 = tpu.concatenate %109, %108, %109 in 0 : vector<1x16xf32>, vector<4x16xf32>, vector<1x16xf32> -> vector<6x16xf32>
    %111 = vector.extract_strided_slice %110 {offsets = [0, 0], sizes = [1, 16], strides = [1, 1]} : vector<6x16xf32> to vector<1x16xf32>
    %112 = vector.extract_strided_slice %110 {offsets = [1, 0], sizes = [1, 16], strides = [1, 1]} : vector<6x16xf32> to vector<1x16xf32>
    %113 = vector.extract_strided_slice %110 {offsets = [2, 0], sizes = [1, 16], strides = [1, 1]} : vector<6x16xf32> to vector<1x16xf32>
    %114 = vector.extract_strided_slice %110 {offsets = [3, 0], sizes = [1, 16], strides = [1, 1]} : vector<6x16xf32> to vector<1x16xf32>
    %115 = tpu.concatenate %111, %112, %113, %114 in 1 : vector<1x16xf32>, vector<1x16xf32>, vector<1x16xf32>, vector<1x16xf32> -> vector<1x64xf32>
    %116 = vector.extract_strided_slice %110 {offsets = [2, 0], sizes = [1, 16], strides = [1, 1]} : vector<6x16xf32> to vector<1x16xf32>
    %117 = vector.extract_strided_slice %110 {offsets = [3, 0], sizes = [1, 16], strides = [1, 1]} : vector<6x16xf32> to vector<1x16xf32>
    %118 = vector.extract_strided_slice %110 {offsets = [4, 0], sizes = [1, 16], strides = [1, 1]} : vector<6x16xf32> to vector<1x16xf32>
    %119 = vector.extract_strided_slice %110 {offsets = [5, 0], sizes = [1, 16], strides = [1, 1]} : vector<6x16xf32> to vector<1x16xf32>
    %120 = tpu.concatenate %116, %117, %118, %119 in 1 : vector<1x16xf32>, vector<1x16xf32>, vector<1x16xf32>, vector<1x16xf32> -> vector<1x64xf32>
    %121 = tpu.concatenate %115, %120 in 0 : vector<1x64xf32>, vector<1x64xf32> -> vector<2x64xf32>
    %122 = tpu.concatenate %107, %121 in 0 : vector<2x64xf32>, vector<2x64xf32> -> vector<4x64xf32>
    %c0_27 = arith.constant 0 : index
    %c0_28 = arith.constant 0 : index
    %123 = vector.load %arg7[%c0_27, %c0_28] : memref<64x32xf32, #tpu.memory_space<vmem>>, vector<64x32xf32>
    %cst_29 = arith.constant dense<0.000000e+00> : vector<4x32xf32>
    %124 = tpu.matmul %122, %123, %cst_29 {dimension_numbers = #tpu.dot_dimension_numbers<[1], [0], [0], [1], [0, 0, 1, 1], [], []>} : vector<4x64xf32>, vector<64x32xf32>, vector<4x32xf32> -> vector<4x32xf32>
    %c0_30 = arith.constant 0 : index
    %c0_31 = arith.constant 0 : index
    %125 = vector.load %arg8[%c0_30, %c0_31] : memref<1x32xf32, #tpu.memory_space<vmem>>, vector<1x32xf32>
    %126 = vector.broadcast %125 : vector<1x32xf32> to vector<4x32xf32>
    %127 = arith.addf %124, %126 : vector<4x32xf32>
    %cst_32 = arith.constant dense<0.000000e+00> : vector<32xf32>
    %128 = vector.multi_reduction <add>, %127, %cst_32 [0] : vector<4x32xf32> to vector<32xf32>
    %129 = vector.shape_cast %128 : vector<32xf32> to vector<1x32xf32>
    %cst_33 = arith.constant 4.000000e+00 : f32
    %130 = vector.broadcast %cst_33 : f32 to vector<1x32xf32>
    %131 = arith.divf %129, %130 : vector<1x32xf32>
    %132 = vector.broadcast %131 : vector<1x32xf32> to vector<4x32xf32>
    %133 = arith.subf %127, %132 : vector<4x32xf32>
    %134 = arith.mulf %133, %133 : vector<4x32xf32>
    %cst_34 = arith.constant dense<0.000000e+00> : vector<32xf32>
    %135 = vector.multi_reduction <add>, %134, %cst_34 [0] : vector<4x32xf32> to vector<32xf32>
    %136 = vector.shape_cast %135 : vector<32xf32> to vector<1x32xf32>
    %cst_35 = arith.constant 4.000000e+00 : f32
    %137 = vector.broadcast %cst_35 : f32 to vector<1x32xf32>
    %138 = arith.divf %136, %137 : vector<1x32xf32>
    %139 = vector.broadcast %131 : vector<1x32xf32> to vector<4x32xf32>
    %140 = arith.subf %127, %139 : vector<4x32xf32>
    %cst_36 = arith.constant 9.99999974E-6 : f32
    %141 = vector.broadcast %cst_36 : f32 to vector<1x32xf32>
    %142 = arith.addf %138, %141 : vector<1x32xf32>
    %143 = math.rsqrt %142 : vector<1x32xf32>
    %144 = vector.broadcast %143 : vector<1x32xf32> to vector<4x32xf32>
    %145 = arith.mulf %140, %144 : vector<4x32xf32>
    %c0_37 = arith.constant 0 : index
    %c0_38 = arith.constant 0 : index
    %146 = vector.load %arg9[%c0_37, %c0_38] : memref<1x32xf32, #tpu.memory_space<vmem>>, vector<1x32xf32>
    %147 = vector.broadcast %146 : vector<1x32xf32> to vector<4x32xf32>
    %148 = arith.mulf %145, %147 : vector<4x32xf32>
    %c0_39 = arith.constant 0 : index
    %c0_40 = arith.constant 0 : index
    %149 = vector.load %arg10[%c0_39, %c0_40] : memref<1x32xf32, #tpu.memory_space<vmem>>, vector<1x32xf32>
    %150 = vector.broadcast %149 : vector<1x32xf32> to vector<4x32xf32>
    %151 = arith.addf %148, %150 : vector<4x32xf32>
    %cst_41 = arith.constant 0.000000e+00 : f32
    %152 = vector.broadcast %cst_41 : f32 to vector<4x32xf32>
    %153 = arith.cmpf ogt, %151, %152 : vector<4x32xf32>
    %cst_42 = arith.constant 2.000000e-01 : f32
    %154 = vector.broadcast %cst_42 : f32 to vector<4x32xf32>
    %155 = arith.mulf %154, %151 : vector<4x32xf32>
    %156 = arith.select %153, %151, %155 : vector<4x32xi1>, vector<4x32xf32>
    %157 = vector.extract_strided_slice %156 {offsets = [0, 0], sizes = [1, 32], strides = [1, 1]} : vector<4x32xf32> to vector<1x32xf32>
    %158 = vector.extract_strided_slice %156 {offsets = [1, 0], sizes = [1, 32], strides = [1, 1]} : vector<4x32xf32> to vector<1x32xf32>
    %159 = tpu.concatenate %157, %158 in 1 : vector<1x32xf32>, vector<1x32xf32> -> vector<1x64xf32>
    %160 = vector.extract_strided_slice %156 {offsets = [2, 0], sizes = [1, 32], strides = [1, 1]} : vector<4x32xf32> to vector<1x32xf32>
    %161 = vector.extract_strided_slice %156 {offsets = [3, 0], sizes = [1, 32], strides = [1, 1]} : vector<4x32xf32> to vector<1x32xf32>
    %162 = tpu.concatenate %160, %161 in 1 : vector<1x32xf32>, vector<1x32xf32> -> vector<1x64xf32>
    %163 = tpu.concatenate %159, %162 in 0 : vector<1x64xf32>, vector<1x64xf32> -> vector<2x64xf32>
    %c0_43 = arith.constant 0 : index
    %c0_44 = arith.constant 0 : index
    %164 = vector.load %arg11[%c0_43, %c0_44] : memref<64x128xf32, #tpu.memory_space<vmem>>, vector<64x128xf32>
    %cst_45 = arith.constant dense<0.000000e+00> : vector<2x128xf32>
    %165 = tpu.matmul %163, %164, %cst_45 {dimension_numbers = #tpu.dot_dimension_numbers<[1], [0], [0], [1], [0, 0, 1, 1], [], []>} : vector<2x64xf32>, vector<64x128xf32>, vector<2x128xf32> -> vector<2x128xf32>
    %c0_46 = arith.constant 0 : index
    %c0_47 = arith.constant 0 : index
    %166 = vector.load %arg12[%c0_46, %c0_47] : memref<1x128xf32, #tpu.memory_space<vmem>>, vector<1x128xf32>
    %167 = vector.broadcast %166 : vector<1x128xf32> to vector<2x128xf32>
    %168 = arith.addf %165, %167 : vector<2x128xf32>
    %169 = tpu.iota {dimensions = array<i32: 1>} : vector<2x128xi32>
    %170 = math.absf %168 : vector<2x128xf32>
    %cst_48 = arith.constant 0.000000e+00 : f32
    %171 = vector.broadcast %cst_48 : f32 to vector<2x128xf32>
    %172 = arith.subf %171, %170 : vector<2x128xf32>
    %173 = math.exp %172 : vector<2x128xf32>
    %cst_49 = arith.constant 0.000000e+00 : f32
    %174 = vector.broadcast %cst_49 : f32 to vector<2x128xf32>
    %175 = arith.cmpf oge, %168, %174 : vector<2x128xf32>
    %cst_50 = arith.constant 1.000000e+00 : f32
    %176 = vector.broadcast %cst_50 : f32 to vector<2x128xf32>
    %177 = arith.addf %176, %173 : vector<2x128xf32>
    %cst_51 = arith.constant 1.000000e+00 : f32
    %178 = vector.broadcast %cst_51 : f32 to vector<2x128xf32>
    %179 = arith.divf %178, %177 : vector<2x128xf32>
    %cst_52 = arith.constant 1.000000e+00 : f32
    %180 = vector.broadcast %cst_52 : f32 to vector<2x128xf32>
    %181 = arith.addf %180, %173 : vector<2x128xf32>
    %182 = arith.divf %173, %181 : vector<2x128xf32>
    %183 = arith.select %175, %179, %182 : vector<2x128xi1>, vector<2x128xf32>
    %c0_i32 = arith.constant 0 : i32
    %184 = vector.broadcast %c0_i32 : i32 to vector<2x128xi32>
    %185 = arith.cmpi eq, %169, %184 : vector<2x128xi32>
    %cst_53 = arith.constant 0.000000e+00 : f32
    %186 = vector.broadcast %cst_53 : f32 to vector<2x128xf32>
    %187 = arith.select %185, %183, %186 : vector<2x128xi1>, vector<2x128xf32>
    %c1_i32 = arith.constant 1 : i32
    %188 = vector.broadcast %c1_i32 : i32 to vector<2x128xi32>
    %189 = arith.cmpi sge, %169, %188 : vector<2x128xi32>
    %c4_i32 = arith.constant 4 : i32
    %190 = vector.broadcast %c4_i32 : i32 to vector<2x128xi32>
    %191 = arith.cmpi slt, %169, %190 : vector<2x128xi32>
    %192 = arith.andi %189, %191 : vector<2x128xi1>
    %cst_54 = arith.constant -1.000000e+30 : f32
    %193 = vector.broadcast %cst_54 : f32 to vector<2x128xf32>
    %194 = arith.select %192, %168, %193 : vector<2x128xi1>, vector<2x128xf32>
    %cst_55 = arith.constant dense<0xFF800000> : vector<2xf32>
    %195 = vector.multi_reduction <maximumf>, %194, %cst_55 [1] : vector<2x128xf32> to vector<2xf32>
    %196 = vector.shape_cast %195 : vector<2xf32> to vector<2x1xf32>
    %197 = vector.broadcast %196 : vector<2x1xf32> to vector<2x128xf32>
    %198 = arith.subf %194, %197 : vector<2x128xf32>
    %199 = math.exp %198 : vector<2x128xf32>
    %cst_56 = arith.constant dense<0.000000e+00> : vector<2xf32>
    %200 = vector.multi_reduction <add>, %199, %cst_56 [1] : vector<2x128xf32> to vector<2xf32>
    %201 = vector.shape_cast %200 : vector<2xf32> to vector<2x1xf32>
    %202 = vector.broadcast %201 : vector<2x1xf32> to vector<2x128xf32>
    %203 = arith.divf %199, %202 : vector<2x128xf32>
    %204 = arith.select %192, %203, %187 : vector<2x128xi1>, vector<2x128xf32>
    %c4_i32_57 = arith.constant 4 : i32
    %205 = vector.broadcast %c4_i32_57 : i32 to vector<2x128xi32>
    %206 = arith.cmpi sge, %169, %205 : vector<2x128xi32>
    %c9_i32 = arith.constant 9 : i32
    %207 = vector.broadcast %c9_i32 : i32 to vector<2x128xi32>
    %208 = arith.cmpi slt, %169, %207 : vector<2x128xi32>
    %209 = arith.andi %206, %208 : vector<2x128xi1>
    %cst_58 = arith.constant -1.000000e+30 : f32
    %210 = vector.broadcast %cst_58 : f32 to vector<2x128xf32>
    %211 = arith.select %209, %168, %210 : vector<2x128xi1>, vector<2x128xf32>
    %cst_59 = arith.constant dense<0xFF800000> : vector<2xf32>
    %212 = vector.multi_reduction <maximumf>, %211, %cst_59 [1] : vector<2x128xf32> to vector<2xf32>
    %213 = vector.shape_cast %212 : vector<2xf32> to vector<2x1xf32>
    %214 = vector.broadcast %213 : vector<2x1xf32> to vector<2x128xf32>
    %215 = arith.subf %211, %214 : vector<2x128xf32>
    %216 = math.exp %215 : vector<2x128xf32>
    %cst_60 = arith.constant dense<0.000000e+00> : vector<2xf32>
    %217 = vector.multi_reduction <add>, %216, %cst_60 [1] : vector<2x128xf32> to vector<2xf32>
    %218 = vector.shape_cast %217 : vector<2xf32> to vector<2x1xf32>
    %219 = vector.broadcast %218 : vector<2x1xf32> to vector<2x128xf32>
    %220 = arith.divf %216, %219 : vector<2x128xf32>
    %221 = arith.select %209, %220, %204 : vector<2x128xi1>, vector<2x128xf32>
    %c0_61 = arith.constant 0 : index
    %c0_62 = arith.constant 0 : index
    %222 = vector.load %arg13[%c0_61, %c0_62] : memref<2x128xf32, #tpu.memory_space<vmem>>, vector<2x128xf32>
    tpu.vector_store %arg13[%c0_61, %c0_62], %221 {strides = array<i32>} : memref<2x128xf32, #tpu.memory_space<vmem>>, vector<2x128xf32>,
    return
  }
}

</mosaic_0001>

<llo_original>
// kernel: discriminator_forward.1
$region0: #{discriminator_forward.1}
  #allocation0 [shape = 'u32[]', space=smem, size = 0x4, offset = 0x4, fixed_abs, tag = 'smem constant byte address 0x4 - core index']
  #allocation1 [shape = 'u32[144,128]{1,0:T(1,128)}', space=vmem, size = 0x12000, scoped, tag = 'internal scratch']
  %s0 = inlined_call_operand.vmem [shape: f32[16,16], index: 0, kind: input, shape index: {}]
  %s1 = inlined_call_operand.vmem [shape: f32[16,8], index: 1, kind: input, shape index: {}]
  %s2 = inlined_call_operand.vmem [shape: f32[1,8], index: 2, kind: input, shape index: {}]
  %s3 = inlined_call_operand.vmem [shape: f32[32,16], index: 3, kind: input, shape index: {}]
  %s4 = inlined_call_operand.vmem [shape: f32[1,16], index: 4, kind: input, shape index: {}]
  %s5 = inlined_call_operand.vmem [shape: f32[1,16], index: 5, kind: input, shape index: {}]
  %s6 = inlined_call_operand.vmem [shape: f32[1,16], index: 6, kind: input, shape index: {}]
  %s7 = inlined_call_operand.vmem [shape: f32[64,32], index: 7, kind: input, shape index: {}]
  %s8 = inlined_call_operand.vmem [shape: f32[1,32], index: 8, kind: input, shape index: {}]
  %s9 = inlined_call_operand.vmem [shape: f32[1,32], index: 9, kind: input, shape index: {}]
  %s10 = inlined_call_operand.vmem [shape: f32[1,32], index: 10, kind: input, shape index: {}]
  %s11 = inlined_call_operand.vmem [shape: f32[64,128], index: 11, kind: input, shape index: {}]
  %s12 = inlined_call_operand.vmem [shape: f32[1,128], index: 12, kind: input, shape index: {}]
  %s13 = inlined_call_operand.vmem [shape: f32[2,128], index: 13, kind: output, shape index: {}]
  %s14 = sld [smem:[#allocation0]]
  $region62: #{discriminator_forward.1} parent=0
    _
  %s16 = ssub.s32 1, %s14
  %s17 = scalar_select 0, %s16, %s14
  // Predicated region
  $region2: #{discriminator_forward.1} parent=0 // pred_check
    _
  $region3: #{discriminator_forward.1} parent=0 // pred_check_branch
    %19 = sbr.rel (0) target = $region5
  $region4: #{discriminator_forward.1} parent=0 // pred_region
    _
  $region5: #{discriminator_forward.1} parent=0 // pred_fallthru
    _
  // Predicated region
  $region6: #{discriminator_forward.1} parent=0 // pred_check
    _
  $region7: #{discriminator_forward.1} parent=0 // pred_check_branch
    %21 = sbr.rel (0) target = $region9
  $region8: #{discriminator_forward.1} parent=0 // pred_region
    _
  $region9: #{discriminator_forward.1} parent=0 // pred_fallthru
    _
  // Predicated region
  $region10: #{discriminator_forward.1} parent=0 // pred_check
    _
  $region11: #{discriminator_forward.1} parent=0 // pred_check_branch
    %23 = sbr.rel (0) target = $region13
  $region12: #{discriminator_forward.1} parent=0 // pred_region
    _
  $region13: #{discriminator_forward.1} parent=0 // pred_fallthru
    _
  // Predicated region
  $region14: #{discriminator_forward.1} parent=0 // pred_check
    _
  $region15: #{discriminator_forward.1} parent=0 // pred_check_branch
    %25 = sbr.rel (0) target = $region17
  $region16: #{discriminator_forward.1} parent=0 // pred_region
    _
  $region17: #{discriminator_forward.1} parent=0 // pred_fallthru
    _
  // Predicated region
  $region18: #{discriminator_forward.1} parent=0 // pred_check
    _
  $region19: #{discriminator_forward.1} parent=0 // pred_check_branch
    %27 = sbr.rel (0) target = $region21
  $region20: #{discriminator_forward.1} parent=0 // pred_region
    _
  $region21: #{discriminator_forward.1} parent=0 // pred_fallthru
    _
  // Predicated region
  $region22: #{discriminator_forward.1} parent=0 // pred_check
    _
  $region23: #{discriminator_forward.1} parent=0 // pred_check_branch
    %29 = sbr.rel (0) target = $region25
  $region24: #{discriminator_forward.1} parent=0 // pred_region
    _
  $region25: #{discriminator_forward.1} parent=0 // pred_fallthru
    _
  // Predicated region
  $region26: #{discriminator_forward.1} parent=0 // pred_check
    _
  $region27: #{discriminator_forward.1} parent=0 // pred_check_branch
    %31 = sbr.rel (0) target = $region29
  $region28: #{discriminator_forward.1} parent=0 // pred_region
    _
  $region29: #{discriminator_forward.1} parent=0 // pred_fallthru
    _
  // Predicated region
  $region30: #{discriminator_forward.1} parent=0 // pred_check
    _
  $region31: #{discriminator_forward.1} parent=0 // pred_check_branch
    %33 = sbr.rel (0) target = $region33
  $region32: #{discriminator_forward.1} parent=0 // pred_region
    _
  $region33: #{discriminator_forward.1} parent=0 // pred_fallthru
    _
  // Predicated region
  $region34: #{discriminator_forward.1} parent=0 // pred_check
    _
  $region35: #{discriminator_forward.1} parent=0 // pred_check_branch
    %35 = sbr.rel (0) target = $region37
  $region36: #{discriminator_forward.1} parent=0 // pred_region
    _
  $region37: #{discriminator_forward.1} parent=0 // pred_fallthru
    _
  // Predicated region
  $region38: #{discriminator_forward.1} parent=0 // pred_check
    _
  $region39: #{discriminator_forward.1} parent=0 // pred_check_branch
    %37 = sbr.rel (0) target = $region41
  $region40: #{discriminator_forward.1} parent=0 // pred_region
    _
  $region41: #{discriminator_forward.1} parent=0 // pred_fallthru
    _
  // Predicated region
  $region42: #{discriminator_forward.1} parent=0 // pred_check
    _
  $region43: #{discriminator_forward.1} parent=0 // pred_check_branch
    %39 = sbr.rel (0) target = $region45
  $region44: #{discriminator_forward.1} parent=0 // pred_region
    _
  $region45: #{discriminator_forward.1} parent=0 // pred_fallthru
    _
  // Predicated region
  $region46: #{discriminator_forward.1} parent=0 // pred_check
    _
  $region47: #{discriminator_forward.1} parent=0 // pred_check_branch
    %41 = sbr.rel (0) target = $region49
  $region48: #{discriminator_forward.1} parent=0 // pred_region
    _
  $region49: #{discriminator_forward.1} parent=0 // pred_fallthru
    _
  // Predicated region
  $region50: #{discriminator_forward.1} parent=0 // pred_check
    _
  $region51: #{discriminator_forward.1} parent=0 // pred_check_branch
    %43 = sbr.rel (0) target = $region53
  $region52: #{discriminator_forward.1} parent=0 // pred_region
    _
  $region53: #{discriminator_forward.1} parent=0 // pred_fallthru
    _
  %v44 = vld [vmem:[%s0] sm:$0xff]
  %v45 = vld [vmem:[%s0 + $0x8] sm:$0xff]
  %v46 = vld [vmem:[%s1] sm:$0xff]
  %v47 = vld [vmem:[%s1 + $0x8] sm:$0xff]
  %v48 = vld [vmem:[%s2] sm:$0x1]
  %v50 = vlaneseq
  %v51 = vshrl.u32 %v50, 7
  %v52 = vsub.s32 0, %v51
  %v53 = vrot.slane %v48, %v52
  %vm55 = vcmask 130048
  %v57 = vsel %vm55, %v44, 0
  %v60 = vsel %vm55, %v45, 0
  %62 = vmatprep.subr.mxu0 0.0
  %63 = vmatpush1.msra.mxu0 %v46
  %64 = vmatprep.subr.mxu0 0.0
  %65 = vmatpush1.msra.mxu0 %v47
  %66 = vmatprep.subr.mxu0 0.0
  %67 = vmatpush1.msra.mxu0 0.0
  %68 = vmatprep.subr.mxu0 0.0
  %69 = vmatpush1.msra.mxu0 0.0
  %70 = vmatprep.subr.mxu0 0.0
  %71 = vmatpush1.msra.mxu0 0.0
  %72 = vmatprep.subr.mxu0 0.0
  %73 = vmatpush1.msra.mxu0 0.0
  %74 = vmatprep.subr.mxu0 0.0
  %75 = vmatpush1.msra.mxu0 0.0
  %76 = vmatprep.subr.mxu0 0.0
  %77 = vmatpush1.msra.mxu0 0.0
  %78 = vmatprep.subr.mxu0 0.0
  %79 = vmatpush1.msra.mxu0 0.0
  %80 = vmatprep.subr.mxu0 0.0
  %81 = vmatpush1.msra.mxu0 0.0
  %82 = vmatprep.subr.mxu0 0.0
  %83 = vmatpush1.msra.mxu0 0.0
  %84 = vmatprep.subr.mxu0 0.0
  %85 = vmatpush1.msra.mxu0 0.0
  %86 = vmatprep.subr.mxu0 0.0
  %87 = vmatpush1.msra.mxu0 0.0
  %88 = vmatprep.subr.mxu0 0.0
  %89 = vmatpush1.msra.mxu0 0.0
  %90 = vmatprep.subr.mxu0 0.0
  %91 = vmatpush1.msra.mxu0 0.0
  %92 = vmatprep.subr.mxu0 0.0
  %93 = vmatpush1.msra.mxu0 0.0
  %94 = vmatprep.subr.mxu0 0.0
  %95 = vmatpush1.msra.mxu0 0.0
  %96 = vmatprep.subr.mxu0 0.0
  %97 = vmatpush1.msra.mxu0 0.0
  %98 = vmatprep.subr.mxu0 0.0
  %99 = vmatpush1.msra.mxu0 0.0
  %100 = vmatprep.subr.mxu0 0.0
  %101 = vmatpush1.msra.mxu0 0.0
  %102 = vmatprep.subr.mxu0 0.0
  %103 = vmatpush1.msra.mxu0 0.0
  %104 = vmatprep.subr.mxu0 0.0
  %105 = vmatpush1.msra.mxu0 0.0
  %106 = vmatprep.subr.mxu0 0.0
  %107 = vmatpush1.msra.mxu0 0.0
  %108 = vmatprep.subr.mxu0 0.0
  %109 = vmatpush1.msra.mxu0 0.0
  %110 = vmatprep.subr.mxu0 0.0
  %111 = vmatpush1.msra.mxu0 0.0
  %112 = vmatprep.subr.mxu0 0.0
  %113 = vmatpush1.msra.mxu0 0.0
  %114 = vmatprep.subr.mxu0 0.0
  %115 = vmatpush1.msra.mxu0 0.0
  %116 = vmatprep.subr.mxu0 0.0
  %117 = vmatpush1.msra.mxu0 0.0
  %118 = vmatprep.subr.mxu0 0.0
  %119 = vmatpush1.msra.mxu0 0.0
  %120 = vmatprep.subr.mxu0 0.0
  %121 = vmatpush1.msra.mxu0 0.0
  %122 = vmatprep.subr.mxu0 0.0
  %123 = vmatpush1.msra.mxu0 0.0
  %124 = vmatprep.subr.mxu0 0.0
  %125 = vmatpush1.msra.mxu0 0.0
  %126 = vmatprep.mubr.f32.mxu0 0.0
  %127 = vmatmul.mubr.f32.gmra.mrb[0].mxu0 %v57
  %v128 = vpop.f32.mrb[0].mxu0
  %v129 = vadd.f32 %v53, %v128
  %v130 = vpop.f32.mrb[0].mxu0
  %131 = vmatprep.mubr.f32.mxu0 0.0
  %132 = vmatmul.mubr.f32.gmra.mrb[0].mxu0 %v60
  %v133 = vpop.f32.mrb[0].mxu0
  %v134 = vadd.f32 %v53, %v133
  %v135 = vpop.f32.mrb[0].mxu0
  %136 = vdwg.mxu0
  %vm137 = vcmp.gt.f32.partialorder %v129, 0.0
  %vm138 = vcmp.gt.f32.partialorder %v134, 0.0
  %v139 = vmul.f32 %v129, 0.2
  %v140 = vmul.f32 %v134, 0.2
  %v141 = vsel %vm137, %v129, %v139
  %v142 = vsel %vm138, %v134, %v140
  %v144 = vrot.slane %v141, 7
  %vm146 = vcmask 1040384
  %v147 = vsel %vm146, 0.0, %v144
  %v148 = vsel %vm146, %v144, 0.0
  %v150 = vrot.slane %v147, 1
  %151 = vrot.lane.b32.xlu0 %v150, 8
  %v152 = vpop.permute.xlu0 %151
  %v154 = vrot.slane %v147, 2
  %155 = vrot.lane.b32.xlu0 %v154, 16
  %v156 = vpop.permute.xlu0 %155
  %v158 = vrot.slane %v147, 3
  %159 = vrot.lane.b32.xlu0 %v158, 24
  %v160 = vpop.permute.xlu0 %159
  %vm162 = vcmask 64512
  %v163 = vsel %vm162, %v147, %v152
  %v164 = vsel %vm55, %v163, %v156
  %vm165 = vcmask 195584
  %v166 = vsel %vm165, %v164, %v160
  %v168 = vrot.slane %v148, 2
  %169 = vrot.lane.b32.xlu0 %v168, 16
  %v170 = vpop.permute.xlu0 %169
  %v172 = vrot.slane %v148, 3
  %173 = vrot.lane.b32.xlu0 %v172, 24
  %v174 = vpop.permute.xlu0 %173
  %v176 = vsel %vm55, %v163, %v170
  %v177 = vsel %vm165, %v176, %v174
  %v179 = vrot.slane %v166, 1
  %v181 = vrot.slane %v166, 2
  %v184 = vrot.slane %v177, 3
  %v186 = vsel %vm146, %v166, %v179
  %vm187 = vcmask 1041408
  %v188 = vsel %vm187, %v186, %v181
  %vm189 = vcmask 1042432
  %v190 = vsel %vm189, %v188, %v184
  %v192 = vrot.slane %v142, 7
  %v194 = vsel %vm146, 0.0, %v192
  %v195 = vsel %vm146, %v192, 0.0
  %v197 = vrot.slane %v194, 1
  %198 = vrot.lane.b32.xlu0 %v197, 8
  %v199 = vpop.permute.xlu0 %198
  %v201 = vrot.slane %v194, 2
  %202 = vrot.lane.b32.xlu0 %v201, 16
  %v203 = vpop.permute.xlu0 %202
  %v205 = vrot.slane %v194, 3
  %206 = vrot.lane.b32.xlu0 %v205, 24
  %v207 = vpop.permute.xlu0 %206
  %v209 = vsel %vm162, %v194, %v199
  %v210 = vsel %vm55, %v209, %v203
  %v211 = vsel %vm165, %v210, %v207
  %v213 = vrot.slane %v195, 2
  %214 = vrot.lane.b32.xlu0 %v213, 16
  %v215 = vpop.permute.xlu0 %214
  %v217 = vrot.slane %v195, 3
  %218 = vrot.lane.b32.xlu0 %v217, 24
  %v219 = vpop.permute.xlu0 %218
  %v221 = vsel %vm55, %v209, %v215
  %v222 = vsel %vm165, %v221, %v219
  %v224 = vrot.slane %v211, 1
  %v226 = vrot.slane %v211, 2
  %v229 = vrot.slane %v222, 3
  %v231 = vsel %vm146, %v211, %v224
  %v232 = vsel %vm187, %v231, %v226
  %v233 = vsel %vm189, %v232, %v229
  %v235 = vrot.slane %v233, 4
  %vm237 = vcmask 1043456
  %v238 = vsel %vm237, %v190, %v235
  %v239 = vld [vmem:[%s3] sm:$0xff]
  %v240 = vld [vmem:[%s3 + $0x8] sm:$0xff]
  %v241 = vld [vmem:[%s3 + $0x10] sm:$0xff]
  %v242 = vld [vmem:[%s3 + $0x18] sm:$0xff]
  %v243 = vld [vmem:[%s4] sm:$0x1]
  %v245 = vlaneseq
  %v246 = vshrl.u32 %v245, 7
  %v247 = vsub.s32 0, %v246
  %v248 = vrot.slane %v243, %v247
  %vm250 = vcmask 261120
  %v252 = vsel %vm250, %v238, 0
  %254 = vmatprep.subr.mxu0 0.0
  %255 = vmatpush1.msra.mxu0 %v239
  %256 = vmatprep.subr.mxu0 0.0
  %257 = vmatpush1.msra.mxu0 %v240
  %258 = vmatprep.subr.mxu0 0.0
  %259 = vmatpush1.msra.mxu0 %v241
  %260 = vmatprep.subr.mxu0 0.0
  %261 = vmatpush1.msra.mxu0 %v242
  %262 = vmatprep.subr.mxu0 0.0
  %263 = vmatpush1.msra.mxu0 0.0
  %264 = vmatprep.subr.mxu0 0.0
  %265 = vmatpush1.msra.mxu0 0.0
  %266 = vmatprep.subr.mxu0 0.0
  %267 = vmatpush1.msra.mxu0 0.0
  %268 = vmatprep.subr.mxu0 0.0
  %269 = vmatpush1.msra.mxu0 0.0
  %270 = vmatprep.subr.mxu0 0.0
  %271 = vmatpush1.msra.mxu0 0.0
  %272 = vmatprep.subr.mxu0 0.0
  %273 = vmatpush1.msra.mxu0 0.0
  %274 = vmatprep.subr.mxu0 0.0
  %275 = vmatpush1.msra.mxu0 0.0
  %276 = vmatprep.subr.mxu0 0.0
  %277 = vmatpush1.msra.mxu0 0.0
  %278 = vmatprep.subr.mxu0 0.0
  %279 = vmatpush1.msra.mxu0 0.0
  %280 = vmatprep.subr.mxu0 0.0
  %281 = vmatpush1.msra.mxu0 0.0
  %282 = vmatprep.subr.mxu0 0.0
  %283 = vmatpush1.msra.mxu0 0.0
  %284 = vmatprep.subr.mxu0 0.0
  %285 = vmatpush1.msra.mxu0 0.0
  %286 = vmatprep.subr.mxu0 0.0
  %287 = vmatpush1.msra.mxu0 0.0
  %288 = vmatprep.subr.mxu0 0.0
  %289 = vmatpush1.msra.mxu0 0.0
  %290 = vmatprep.subr.mxu0 0.0
  %291 = vmatpush1.msra.mxu0 0.0
  %292 = vmatprep.subr.mxu0 0.0
  %293 = vmatpush1.msra.mxu0 0.0
  %294 = vmatprep.subr.mxu0 0.0
  %295 = vmatpush1.msra.mxu0 0.0
  %296 = vmatprep.subr.mxu0 0.0
  %297 = vmatpush1.msra.mxu0 0.0
  %298 = vmatprep.subr.mxu0 0.0
  %299 = vmatpush1.msra.mxu0 0.0
  %300 = vmatprep.subr.mxu0 0.0
  %301 = vmatpush1.msra.mxu0 0.0
  %302 = vmatprep.subr.mxu0 0.0
  %303 = vmatpush1.msra.mxu0 0.0
  %304 = vmatprep.subr.mxu0 0.0
  %305 = vmatpush1.msra.mxu0 0.0
  %306 = vmatprep.subr.mxu0 0.0
  %307 = vmatpush1.msra.mxu0 0.0
  %308 = vmatprep.subr.mxu0 0.0
  %309 = vmatpush1.msra.mxu0 0.0
  %310 = vmatprep.subr.mxu0 0.0
  %311 = vmatpush1.msra.mxu0 0.0
  %312 = vmatprep.subr.mxu0 0.0
  %313 = vmatpush1.msra.mxu0 0.0
  %314 = vmatprep.subr.mxu0 0.0
  %315 = vmatpush1.msra.mxu0 0.0
  %316 = vmatprep.subr.mxu0 0.0
  %317 = vmatpush1.msra.mxu0 0.0
  %318 = vmatprep.mubr.f32.mxu0 0.0
  %319 = vmatmul.mubr.f32.gmra.mrb[0].mxu0 %v252
  %v320 = vpop.f32.mrb[0].mxu0
  %v321 = vadd.f32 %v248, %v320
  %v322 = vpop.f32.mrb[0].mxu0
  %323 = vdwg.mxu0
  %v324 = vsel %vm55, %v321, 0.0
  %v325 = vrot.slane %v324, 4
  %v326 = vadd.f32 %v324, %v325
  %v327 = vrot.slane %v326, 2
  %v328 = vadd.f32 %v326, %v327
  %v329 = vrot.slane %v328, 1
  %v330 = vadd.f32 %v328, %v329
  %v331 = vrcp.pop 8.0
  %v332 = vmul.f32 %v330, %v331
  %v333 = vsub.f32 %v321, %v332
  %v334 = vmul.f32 %v333, %v333
  %v335 = vsel %vm55, %v334, 0.0
  %v336 = vrot.slane %v335, 4
  %v337 = vadd.f32 %v335, %v336
  %v338 = vrot.slane %v337, 2
  %v339 = vadd.f32 %v337, %v338
  %v340 = vrot.slane %v339, 1
  %v341 = vadd.f32 %v339, %v340
  %v342 = vmul.f32 %v341, %v331
  %v343 = vadd.f32 %v342, 1e-05
  %v344 = vrsqrt.pop %v343
  %v345 = vmul.f32 %v333, %v344
  %v346 = vld [vmem:[%s5] sm:$0x1]
  %v348 = vlaneseq
  %v349 = vshrl.u32 %v348, 7
  %v350 = vsub.s32 0, %v349
  %v351 = vrot.slane %v346, %v350
  %v353 = vmul.f32 %v345, %v351
  %v354 = vld [vmem:[%s6] sm:$0x1]
  %v356 = vlaneseq
  %v357 = vshrl.u32 %v356, 7
  %v358 = vsub.s32 0, %v357
  %v359 = vrot.slane %v354, %v358
  %v361 = vadd.f32 %v353, %v359
  %vm362 = vcmp.gt.f32.partialorder %v361, 0.0
  %v363 = vmul.f32 %v361, 0.2
  %v364 = vsel %vm362, %v361, %v363
  %v366 = vrot.slane %v364, 7
  %v368 = vsel %vm146, 0.0, %v366
  %vm369 = vcmask 1044480
  %v370 = vsel %vm369, %v368, 0.0
  %v372 = vrot.slane %v370, 1
  %373 = vrot.lane.b32.xlu0 %v372, 16
  %v374 = vpop.permute.xlu0 %373
  %v376 = vrot.slane %v370, 2
  %377 = vrot.lane.b32.xlu0 %v376, 32
  %v378 = vpop.permute.xlu0 %377
  %v380 = vrot.slane %v370, 3
  %381 = vrot.lane.b32.xlu0 %v380, 48
  %v382 = vpop.permute.xlu0 %381
  %v384 = vsel %vm55, %v370, %v374
  %v385 = vsel %vm250, %v384, %v378
  %vm386 = vcmask 392192
  %v387 = vsel %vm386, %v385, %v382
  %v389 = vrot.slane %v387, 1
  %v391 = vsel %vm146, %v387, %v389
  %v392 = vrot.slane %v364, 3
  %v394 = vsel %vm146, 0.0, %v392
  %v395 = vsel %vm369, %v394, 0.0
  %v397 = vrot.slane %v395, 1
  %398 = vrot.lane.b32.xlu0 %v397, 16
  %v399 = vpop.permute.xlu0 %398
  %v401 = vrot.slane %v395, 2
  %402 = vrot.lane.b32.xlu0 %v401, 32
  %v403 = vpop.permute.xlu0 %402
  %v405 = vrot.slane %v395, 3
  %406 = vrot.lane.b32.xlu0 %v405, 48
  %v407 = vpop.permute.xlu0 %406
  %v409 = vsel %vm55, %v395, %v399
  %v410 = vsel %vm250, %v409, %v403
  %v411 = vsel %vm386, %v410, %v407
  %v413 = vrot.slane %v411, 1
  %v415 = vsel %vm146, %v411, %v413
  %v417 = vrot.slane %v415, 6
  %v419 = vsel %vm187, %v391, %v417
  %v420 = vld [vmem:[%s7] sm:$0xff]
  %v421 = vld [vmem:[%s7 + $0x8] sm:$0xff]
  %v422 = vld [vmem:[%s7 + $0x10] sm:$0xff]
  %v423 = vld [vmem:[%s7 + $0x18] sm:$0xff]
  %v424 = vld [vmem:[%s7 + $0x20] sm:$0xff]
  %v425 = vld [vmem:[%s7 + $0x28] sm:$0xff]
  %v426 = vld [vmem:[%s7 + $0x30] sm:$0xff]
  %v427 = vld [vmem:[%s7 + $0x38] sm:$0xff]
  %v428 = vld [vmem:[%s8] sm:$0x1]
  %v430 = vlaneseq
  %v431 = vshrl.u32 %v430, 7
  %v432 = vsub.s32 0, %v431
  %v433 = vrot.slane %v428, %v432
  %vm435 = vcmask 523264
  %v437 = vsel %vm435, %v419, 0
  %439 = vmatprep.subr.mxu0 0.0
  %440 = vmatpush1.msra.mxu0 %v420
  %441 = vmatprep.subr.mxu0 0.0
  %442 = vmatpush1.msra.mxu0 %v421
  %443 = vmatprep.subr.mxu0 0.0
  %444 = vmatpush1.msra.mxu0 %v422
  %445 = vmatprep.subr.mxu0 0.0
  %446 = vmatpush1.msra.mxu0 %v423
  %447 = vmatprep.subr.mxu0 0.0
  %448 = vmatpush1.msra.mxu0 %v424
  %449 = vmatprep.subr.mxu0 0.0
  %450 = vmatpush1.msra.mxu0 %v425
  %451 = vmatprep.subr.mxu0 0.0
  %452 = vmatpush1.msra.mxu0 %v426
  %453 = vmatprep.subr.mxu0 0.0
  %454 = vmatpush1.msra.mxu0 %v427
  %455 = vmatprep.subr.mxu0 0.0
  %456 = vmatpush1.msra.mxu0 0.0
  %457 = vmatprep.subr.mxu0 0.0
  %458 = vmatpush1.msra.mxu0 0.0
  %459 = vmatprep.subr.mxu0 0.0
  %460 = vmatpush1.msra.mxu0 0.0
  %461 = vmatprep.subr.mxu0 0.0
  %462 = vmatpush1.msra.mxu0 0.0
  %463 = vmatprep.subr.mxu0 0.0
  %464 = vmatpush1.msra.mxu0 0.0
  %465 = vmatprep.subr.mxu0 0.0
  %466 = vmatpush1.msra.mxu0 0.0
  %467 = vmatprep.subr.mxu0 0.0
  %468 = vmatpush1.msra.mxu0 0.0
  %469 = vmatprep.subr.mxu0 0.0
  %470 = vmatpush1.msra.mxu0 0.0
  %471 = vmatprep.subr.mxu0 0.0
  %472 = vmatpush1.msra.mxu0 0.0
  %473 = vmatprep.subr.mxu0 0.0
  %474 = vmatpush1.msra.mxu0 0.0
  %475 = vmatprep.subr.mxu0 0.0
  %476 = vmatpush1.msra.mxu0 0.0
  %477 = vmatprep.subr.mxu0 0.0
  %478 = vmatpush1.msra.mxu0 0.0
  %479 = vmatprep.subr.mxu0 0.0
  %480 = vmatpush1.msra.mxu0 0.0
  %481 = vmatprep.subr.mxu0 0.0
  %482 = vmatpush1.msra.mxu0 0.0
  %483 = vmatprep.subr.mxu0 0.0
  %484 = vmatpush1.msra.mxu0 0.0
  %485 = vmatprep.subr.mxu0 0.0
  %486 = vmatpush1.msra.mxu0 0.0
  %487 = vmatprep.subr.mxu0 0.0
  %488 = vmatpush1.msra.mxu0 0.0
  %489 = vmatprep.subr.mxu0 0.0
  %490 = vmatpush1.msra.mxu0 0.0
  %491 = vmatprep.subr.mxu0 0.0
  %492 = vmatpush1.msra.mxu0 0.0
  %493 = vmatprep.subr.mxu0 0.0
  %494 = vmatpush1.msra.mxu0 0.0
  %495 = vmatprep.subr.mxu0 0.0
  %496 = vmatpush1.msra.mxu0 0.0
  %497 = vmatprep.subr.mxu0 0.0
  %498 = vmatpush1.msra.mxu0 0.0
  %499 = vmatprep.subr.mxu0 0.0
  %500 = vmatpush1.msra.mxu0 0.0
  %501 = vmatprep.subr.mxu0 0.0
  %502 = vmatpush1.msra.mxu0 0.0
  %503 = vmatprep.mubr.f32.mxu0 0.0
  %504 = vmatmul.mubr.f32.gmra.mrb[0].mxu0 %v437
  %v505 = vpop.f32.mrb[0].mxu0
  %v506 = vadd.f32 %v433, %v505
  %v507 = vpop.f32.mrb[0].mxu0
  %508 = vdwg.mxu0
  %vm509 = vcmask 257024
  %v510 = vsel %vm509, %v506, 0.0
  %v511 = vrot.slane %v510, 4
  %v512 = vadd.f32 %v510, %v511
  %v513 = vrot.slane %v512, 2
  %v514 = vadd.f32 %v512, %v513
  %v515 = vrot.slane %v514, 1
  %v516 = vadd.f32 %v514, %v515
  %v517 = vrcp.pop 4.0
  %v518 = vmul.f32 %v516, %v517
  %v519 = vsub.f32 %v506, %v518
  %v520 = vmul.f32 %v519, %v519
  %v521 = vsel %vm509, %v520, 0.0
  %v522 = vrot.slane %v521, 4
  %v523 = vadd.f32 %v521, %v522
  %v524 = vrot.slane %v523, 2
  %v525 = vadd.f32 %v523, %v524
  %v526 = vrot.slane %v525, 1
  %v527 = vadd.f32 %v525, %v526
  %v528 = vmul.f32 %v527, %v517
  %v529 = vadd.f32 %v528, 1e-05
  %v530 = vrsqrt.pop %v529
  %v531 = vmul.f32 %v519, %v530
  %v532 = vld [vmem:[%s9] sm:$0x1]
  %v534 = vlaneseq
  %v535 = vshrl.u32 %v534, 7
  %v536 = vsub.s32 0, %v535
  %v537 = vrot.slane %v532, %v536
  %v539 = vmul.f32 %v531, %v537
  %v540 = vld [vmem:[%s10] sm:$0x1]
  %v542 = vlaneseq
  %v543 = vshrl.u32 %v542, 7
  %v544 = vsub.s32 0, %v543
  %v545 = vrot.slane %v540, %v544
  %v547 = vadd.f32 %v539, %v545
  %vm548 = vcmp.gt.f32.partialorder %v547, 0.0
  %v549 = vmul.f32 %v547, 0.2
  %v550 = vsel %vm548, %v547, %v549
  %v552 = vrot.slane %v550, 1
  %553 = vrot.lane.b32.xlu0 %v552, 32
  %v554 = vpop.permute.xlu0 %553
  %v556 = vsel %vm250, %v550, %v554
  %v558 = vrot.slane %v556, 1
  %v560 = vsel %vm146, %v556, %v558
  %v561 = vld [vmem:[%s11] sm:$0xff]
  %v562 = vld [vmem:[%s11 + $0x8] sm:$0xff]
  %v563 = vld [vmem:[%s11 + $0x10] sm:$0xff]
  %v564 = vld [vmem:[%s11 + $0x18] sm:$0xff]
  %v565 = vld [vmem:[%s11 + $0x20] sm:$0xff]
  %v566 = vld [vmem:[%s11 + $0x28] sm:$0xff]
  %v567 = vld [vmem:[%s11 + $0x30] sm:$0xff]
  %v568 = vld [vmem:[%s11 + $0x38] sm:$0xff]
  %v569 = vld [vmem:[%s12] sm:$0x1]
  %v571 = vlaneseq
  %v572 = vshrl.u32 %v571, 7
  %v573 = vsub.s32 0, %v572
  %v574 = vrot.slane %v569, %v573
  %v577 = vsel %vm435, %v560, 0
  %579 = vmatprep.subr.mxu0 0.0
  %580 = vmatpush1.msra.mxu0 %v561
  %581 = vmatprep.subr.mxu0 0.0
  %582 = vmatpush1.msra.mxu0 %v562
  %583 = vmatprep.subr.mxu0 0.0
  %584 = vmatpush1.msra.mxu0 %v563
  %585 = vmatprep.subr.mxu0 0.0
  %586 = vmatpush1.msra.mxu0 %v564
  %587 = vmatprep.subr.mxu0 0.0
  %588 = vmatpush1.msra.mxu0 %v565
  %589 = vmatprep.subr.mxu0 0.0
  %590 = vmatpush1.msra.mxu0 %v566
  %591 = vmatprep.subr.mxu0 0.0
  %592 = vmatpush1.msra.mxu0 %v567
  %593 = vmatprep.subr.mxu0 0.0
  %594 = vmatpush1.msra.mxu0 %v568
  %595 = vmatprep.subr.mxu0 0.0
  %596 = vmatpush1.msra.mxu0 0.0
  %597 = vmatprep.subr.mxu0 0.0
  %598 = vmatpush1.msra.mxu0 0.0
  %599 = vmatprep.subr.mxu0 0.0
  %600 = vmatpush1.msra.mxu0 0.0
  %601 = vmatprep.subr.mxu0 0.0
  %602 = vmatpush1.msra.mxu0 0.0
  %603 = vmatprep.subr.mxu0 0.0
  %604 = vmatpush1.msra.mxu0 0.0
  %605 = vmatprep.subr.mxu0 0.0
  %606 = vmatpush1.msra.mxu0 0.0
  %607 = vmatprep.subr.mxu0 0.0
  %608 = vmatpush1.msra.mxu0 0.0
  %609 = vmatprep.subr.mxu0 0.0
  %610 = vmatpush1.msra.mxu0 0.0
  %611 = vmatprep.subr.mxu0 0.0
  %612 = vmatpush1.msra.mxu0 0.0
  %613 = vmatprep.subr.mxu0 0.0
  %614 = vmatpush1.msra.mxu0 0.0
  %615 = vmatprep.subr.mxu0 0.0
  %616 = vmatpush1.msra.mxu0 0.0
  %617 = vmatprep.subr.mxu0 0.0
  %618 = vmatpush1.msra.mxu0 0.0
  %619 = vmatprep.subr.mxu0 0.0
  %620 = vmatpush1.msra.mxu0 0.0
  %621 = vmatprep.subr.mxu0 0.0
  %622 = vmatpush1.msra.mxu0 0.0
  %623 = vmatprep.subr.mxu0 0.0
  %624 = vmatpush1.msra.mxu0 0.0
  %625 = vmatprep.subr.mxu0 0.0
  %626 = vmatpush1.msra.mxu0 0.0
  %627 = vmatprep.subr.mxu0 0.0
  %628 = vmatpush1.msra.mxu0 0.0
  %629 = vmatprep.subr.mxu0 0.0
  %630 = vmatpush1.msra.mxu0 0.0
  %631 = vmatprep.subr.mxu0 0.0
  %632 = vmatpush1.msra.mxu0 0.0
  %633 = vmatprep.subr.mxu0 0.0
  %634 = vmatpush1.msra.mxu0 0.0
  %635 = vmatprep.subr.mxu0 0.0
  %636 = vmatpush1.msra.mxu0 0.0
  %637 = vmatprep.subr.mxu0 0.0
  %638 = vmatpush1.msra.mxu0 0.0
  %639 = vmatprep.subr.mxu0 0.0
  %640 = vmatpush1.msra.mxu0 0.0
  %641 = vmatprep.subr.mxu0 0.0
  %642 = vmatpush1.msra.mxu0 0.0
  %643 = vmatprep.mubr.f32.mxu0 0.0
  %644 = vmatmul.mubr.f32.gmra.mrb[0].mxu0 %v577
  %v645 = vpop.f32.mrb[0].mxu0
  %v646 = vadd.f32 %v574, %v645
  %v647 = vpop.f32.mrb[0].mxu0
  %648 = vdwg.mxu0
  %v649 = vlaneseq
  %v650 = vand.u32 %v649, 127
  %v651 = vand.u32 2147483647, %v646
  %v652 = vsub.f32 0.0, %v651
  %v653 = vmul.f32 %v652, 1.442695
  %v654 = vpow.pop %v653
  %vm655 = vcmp.ge.f32.partialorder %v646, 0.0
  %v656 = vadd.f32 %v654, 1.0
  %v657 = vrcp.pop %v656
  %v658 = vmul.f32 1.0, %v657
  %v659 = vmul.f32 %v654, %v657
  %v660 = vsel %vm655, %v658, %v659
  %vm661 = vcmp.eq.s32.totalorder %v650, 0
  %v662 = vsel %vm661, %v660, 0.0
  %vm663 = vcmp.ge.s32.totalorder %v650, 1
  %vm664 = vcmp.lt.s32.totalorder %v650, 4
  %vm665 = vmand %vm663, %vm664
  %v666 = vsel %vm665, %v646, -1e+30
  %v667 = vsel %vm187, %v666, -inf
  %668 = vmax.xlane.f32.xlu0 %v667
  %v669 = vpop.xlane.xlu0 %668
  %v670 = vsub.f32 %v666, %v669
  %v671 = vmul.f32 %v670, 1.442695
  %v672 = vpow.pop %v671
  %v673 = vsel %vm187, %v672, 0.0
  %674 = vadd.xlane.f32.xlu0 %v673
  %v675 = vpop.xlane.xlu0 %674
  %v676 = vrcp.pop %v675
  %v677 = vmul.f32 %v672, %v676
  %v678 = vsel %vm665, %v677, %v662
  %vm679 = vcmp.ge.s32.totalorder %v650, 4
  %vm680 = vcmp.lt.s32.totalorder %v650, 9
  %vm681 = vmand %vm679, %vm680
  %v682 = vsel %vm681, %v646, -1e+30
  %v683 = vsel %vm187, %v682, -inf
  %684 = vmax.xlane.f32.xlu0 %v683
  %v685 = vpop.xlane.xlu0 %684
  %v686 = vsub.f32 %v682, %v685
  %v687 = vmul.f32 %v686, 1.442695
  %v688 = vpow.pop %v687
  %v689 = vsel %vm187, %v688, 0.0
  %690 = vadd.xlane.f32.xlu0 %v689
  %v691 = vpop.xlane.xlu0 %690
  %v692 = vrcp.pop %v691
  %v693 = vmul.f32 %v688, %v692
  %v694 = vsel %vm681, %v693, %v678
  %695 = vst [vmem:[%s13] sm:$0x3] %v694
  // Predicated region
  $region54: #{discriminator_forward.1} parent=0 // pred_check
    _
  $region55: #{discriminator_forward.1} parent=0 // pred_check_branch
    %697 = sbr.rel (0) target = $region57
  $region56: #{discriminator_forward.1} parent=0 // pred_region
    _
  $region57: #{discriminator_forward.1} parent=0 // pred_fallthru
    _
  // Predicated region
  $region58: #{discriminator_forward.1} parent=0 // pred_check
    _
  $region59: #{discriminator_forward.1} parent=0 // pred_check_branch
    %699 = sbr.rel (0) target = $region61
  $region60: #{discriminator_forward.1} parent=0 // pred_region
    _
  $region61: #{discriminator_forward.1} parent=0 // pred_fallthru
    _

</llo_original>
